<compile_context>
chip_gen: v5e
topology: v5e:2x2
jax: 0.10.0
libtpu: 0.0.40
codegen_flags: <defaults>
</compile_context>

<pallas_src>
import functools

import jax
import jax.numpy as jnp
from jax import lax
from jax.experimental import pallas as pl
from jax.experimental.pallas import tpu as pltpu


# ----------------------------------------------------------------------------
# Tiling helpers
# ----------------------------------------------------------------------------
def _round_up(x, a):
    return ((x + a - 1) // a) * a


# ----------------------------------------------------------------------------
# Pallas kernel: streamed pairwise squared distances + running top-k (smallest)
# Outputs are k-major / lane-dense: score (b, k, m), idx (b, k, m).
# ----------------------------------------------------------------------------
def _graph_topk_kernel(xe_ref, yet_ref, xn_ref, yn_ref, score_ref, idx_ref,
                       run_s_ref, run_i_ref, iota_ref, *, k):
    ni = pl.program_id(2)
    tn = xe_ref.shape[1]
    tm = yet_ref.shape[2]

    # init running top-k state (and the constant tile-local row iota) when a
    # new (batch, m-tile) starts
    @pl.when(ni == 0)
    def _():
        run_s_ref[...] = jnp.full_like(run_s_ref, jnp.inf)
        run_i_ref[...] = jnp.zeros_like(run_i_ref)
        iota_ref[...] = lax.broadcasted_iota(jnp.int32, (tn, tm), 0)

    xe = xe_ref[0]                        # (tn, e)  bf16 database patches (this n-tile)
    yet = yet_ref[0]                      # (e, tm)  bf16 queries, pre-transposed
    xn = xn_ref[0]                        # (tn, 1)  f32 ||xe_j||^2

    # partial squared distance in (database, query) orientation:
    #   d[j, i] = -2 xe_j.ye_i + ||xe_j||^2        (the + ||ye_i||^2 term is a
    #   per-column constant and is deferred to the final score emit)
    d = lax.dot_general(xe, yet, (((1,), (0,)), ((), ())),
                        preferred_element_type=jnp.float32)        # (tn, tm) f32
    d = -2.0 * d + xn

    iota = iota_ref[...]                  # (tn, tm) tile-local row indices
    run_s = run_s_ref[...]                # (k, tm) running best partial distances
    run_i = run_i_ref[...]                # (k, tm) running best global indices

    base = ni * tn
    sent_local = jnp.int32(tn)            # > any tile-local row index; base+tn <= n_pad
    sent_r = jnp.int32(jnp.iinfo(jnp.int32).max)
    row_id = lax.broadcasted_iota(jnp.int32, (k, tm), 0)
    new_s = jnp.zeros((k, tm), jnp.float32)
    new_i = jnp.zeros((k, tm), jnp.int32)

    work_d = d
    work_r = run_s
    for kk in range(k):
        dmin = jnp.min(work_d, axis=0, keepdims=True)              # (1, tm)
        rmin = jnp.min(work_r, axis=0, keepdims=True)              # (1, tm)
        cur_min = jnp.minimum(dmin, rmin)
        dmask = work_d <= cur_min
        rmask = work_r <= cur_min
        cand_d = jnp.min(jnp.where(dmask, iota, sent_local),
                         axis=0, keepdims=True) + base             # (1, tm) global
        cand_r = jnp.min(jnp.where(rmask, run_i, sent_r),
                         axis=0, keepdims=True)                    # (1, tm)
        cur_idx = jnp.minimum(cand_d, cand_r)                      # smallest-index tiebreak
        new_s = jnp.where(row_id == kk, cur_min, new_s)
        new_i = jnp.where(row_id == kk, cur_idx, new_i)
        if kk < k - 1:
            # invalidate exactly the chosen candidate; global indices are unique
            # across tiles, so no mask AND is needed.
            work_d = jnp.where(iota == (cur_idx - base), jnp.inf, work_d)
            work_r = jnp.where(run_i == cur_idx, jnp.inf, work_r)

    run_s_ref[...] = new_s
    run_i_ref[...] = new_i

    # after the last n-tile, add the deferred ||ye||^2 and emit score + indices
    @pl.when(ni == pl.num_programs(2) - 1)
    def _():
        yn = yn_ref[0]                                             # (1, tm) f32
        score_ref[0] = jnp.exp(-(new_s + yn) / 10.0)
        idx_ref[0] = new_i


def graph_topk_pallas(xe_flat, ye_flat, k, *, tm_target=256, tn_target=1024):
    """xe_flat: (b, n, e) database, ye_flat: (b, m, e) queries, both f32.
    Returns (score (b, k, m) f32 = exp(-D_topk/10), idx (b, k, m) int32),
    both k-major / lane-dense.  (PyTorch topk returns int64; we use int32.)

    tm_target/tn_target are the tuning knobs; defaults fit well under the
    32 MiB scoped-VMEM limit set below on every generation (v5e/v6e/v7x).
    """
    b, n, e = xe_flat.shape
    m = ye_flat.shape[1]

    # tile sizes: tm lane-aligned to 128 (lane-dense outputs), tn sublane-
    # aligned to 16 (bf16 packing).  Inputs are padded to tile multiples so a
    # non-divisible n/m never inflates the (tn, tm) temporaries.
    tm = min(tm_target, _round_up(m, 128))
    tn = min(tn_target, _round_up(n, 16))
    m_pad = _round_up(m, tm)
    n_pad = _round_up(n, tn)

    xn = jnp.sum(xe_flat * xe_flat, axis=-1)          # (b, n) f32
    yn = jnp.sum(ye_flat * ye_flat, axis=-1)          # (b, m) f32

    if n_pad != n:
        xe_flat = jnp.pad(xe_flat, ((0, 0), (0, n_pad - n), (0, 0)))
        # padded database rows get a huge norm so they never enter the top-k
        xn = jnp.pad(xn, ((0, 0), (0, n_pad - n)), constant_values=1e30)
    if m_pad != m:
        ye_flat = jnp.pad(ye_flat, ((0, 0), (0, m_pad - m), (0, 0)))
        yn = jnp.pad(yn, ((0, 0), (0, m_pad - m)))

    xe_b = xe_flat.astype(jnp.bfloat16)                              # (b, n_pad, e)
    yet_b = jnp.transpose(ye_flat, (0, 2, 1)).astype(jnp.bfloat16)   # (b, e, m_pad)
    xn3 = xn[:, :, None]                                             # (b, n_pad, 1)
    yn3 = yn[:, None, :]                                             # (b, 1, m_pad)

    grid = (b, m_pad // tm, n_pad // tn)
    kernel = functools.partial(_graph_topk_kernel, k=k)
    score, idx = pl.pallas_call(
        kernel,
        out_shape=(jax.ShapeDtypeStruct((b, k, m_pad), jnp.float32),
                   jax.ShapeDtypeStruct((b, k, m_pad), jnp.int32)),
        grid_spec=pltpu.PrefetchScalarGridSpec(
            num_scalar_prefetch=0,
            grid=grid,
            in_specs=[
                # streamed bf16 database tile (the only per-n-step DMA)
                pl.BlockSpec((1, tn, e), lambda bi, mi, ni: (bi, ni, 0)),
                # resident bf16 query tile, canonical (K, N) orientation
                pl.BlockSpec((1, e, tm), lambda bi, mi, ni: (bi, 0, mi)),
                # f32 ||xe||^2 for this n-tile
                pl.BlockSpec((1, tn, 1), lambda bi, mi, ni: (bi, ni, 0)),
                # f32 ||ye||^2 for this m-tile (used only at the final step)
                pl.BlockSpec((1, 1, tm), lambda bi, mi, ni: (bi, 0, mi)),
            ],
            out_specs=(pl.BlockSpec((1, k, tm), lambda bi, mi, ni: (bi, 0, mi)),
                       pl.BlockSpec((1, k, tm), lambda bi, mi, ni: (bi, 0, mi))),
            scratch_shapes=[pltpu.VMEM((k, tm), jnp.float32),
                            pltpu.VMEM((k, tm), jnp.int32),
                            pltpu.VMEM((tn, tm), jnp.int32)]),
        compiler_params=pltpu.CompilerParams(
            dimension_semantics=("parallel", "parallel", "arbitrary"),
            # covers v5e's 16 MiB default scoped VMEM; well under v7x physical
            vmem_limit_bytes=32 * 1024 * 1024),
    )(xe_b, yet_b, xn3, yn3)

    if m_pad != m:
        score = score[:, :, :m]
        idx = idx[:, :, :m]
    return score, idx


# ----------------------------------------------------------------------------
# Plain-JAX glue: im2patch / patch2im (same semantics as ops.im2patch/patch2im
# for the non-overlapping configuration used here)
# ----------------------------------------------------------------------------
def im2patch(x, patchsize, stride, padding=None, returnpadding=False):
    b, c, h, w = x.shape
    if padding is None:
        padtop = padleft = 0
        padbottom = (stride - (h - patchsize) % stride) % stride
        padright = (stride - (w - patchsize) % stride) % stride
    else:
        padtop, padbottom, padleft, padright = padding
    xp = jnp.pad(x, ((0, 0), (0, 0), (padtop, padbottom), (padleft, padright)))
    Hp = h + padtop + padbottom
    Wp = w + padleft + padright
    n1 = (Hp - patchsize) // stride + 1
    n2 = (Wp - patchsize) // stride + 1
    r = (jnp.arange(n1) * stride)[:, None] + jnp.arange(patchsize)[None, :]   # (n1, p)
    cc = (jnp.arange(n2) * stride)[:, None] + jnp.arange(patchsize)[None, :]  # (n2, p)
    patches = xp[:, :, r, :]              # (b, c, n1, p, Wp)
    patches = patches[:, :, :, :, cc]     # (b, c, n1, p, n2, p)
    patches = patches.transpose(0, 1, 3, 5, 2, 4)  # (b, c, p, p, n1, n2)
    if returnpadding:
        return patches, (padtop, padbottom, padleft, padright)
    return patches


def patch2im(patches, patchsize, stride, padding):
    # TODO(synk): overlap normalization of the original ops.patch2im is ambiguous;
    # with stride == patchsize (non-overlapping, as used here) sum == average.
    b, c, p1, p2, n1, n2 = patches.shape
    padtop, padbottom, padleft, padright = padding
    Hp = (n1 - 1) * stride + p1
    Wp = (n2 - 1) * stride + p2
    r = (jnp.arange(n1) * stride)[:, None] + jnp.arange(p1)[None, :]   # (n1, p1)
    cc = (jnp.arange(n2) * stride)[:, None] + jnp.arange(p2)[None, :]  # (n2, p2)
    pt = patches.transpose(0, 1, 4, 2, 5, 3)  # (b, c, n1, p1, n2, p2)
    im = jnp.zeros((b, c, Hp, Wp), patches.dtype)
    im = im.at[:, :, r[:, :, None, None], cc[None, None, :, :]].add(pt)
    return im[:, :, padtop:Hp - padbottom, padleft:Wp - padright]


# ----------------------------------------------------------------------------
# GraphConstruct forward
# ----------------------------------------------------------------------------
class GraphConstruct:
    def __init__(self, scale, indexer, k, patchsize, stride, padding=None):
        self.scale = scale
        self.indexer = indexer        # unused (WITH_WINDOW = False)
        self.k = k
        self.patchsize = patchsize
        self.stride = stride
        self.padding = padding

    def __call__(self, xe, ye):
        return self.forward(xe, ye)

    def forward(self, xe, ye):
        H, W = ye.shape[2], ye.shape[3]
        s, k = self.scale, self.k
        xe_patch = im2patch(xe, self.patchsize, self.stride, self.padding)
        ye_patch, pad = im2patch(ye, self.patchsize, self.stride, self.padding,
                                 returnpadding=True)
        _, _, _, _, n1, n2 = xe_patch.shape
        b, ce, e1, e2, m1, m2 = ye_patch.shape
        n = n1 * n2
        m = m1 * m2
        e = ce * e1 * e2
        xe_flat = xe_patch.transpose(0, 4, 5, 1, 2, 3).reshape(b, n, e)
        ye_flat = ye_patch.transpose(0, 4, 5, 1, 2, 3).reshape(b, m, e)

        # --- hot path: Pallas kernel (streamed distances + running top-k) ---
        score_km, idx_km = graph_topk_pallas(xe_flat, ye_flat, k)   # (b,k,m) each
        idx_k = jnp.transpose(idx_km, (0, 2, 1))                    # (b, m, k)

        # --- WITH_DIFF: gather k neighbor rows (XLA gather, outside kernel),
        #     then the per-channel |diff| reduction on the small (b,m,k,e) slab
        # TODO(synk): profile this gather for large (m, n); switch to a
        # scalar-prefetch Pallas row gather if it dominates end-to-end time.
        gathered = jax.vmap(lambda x, i: x[i])(xe_flat, idx_k)      # (b, m, k, e)
        diff = jnp.abs(ye_flat[:, :, None, :] - gathered)           # (b, m, k, e)
        diff = diff.reshape(b, m, k, ce, e1 * e2).sum(axis=-1)      # (b, m, k, ce)
        diff_red = jnp.transpose(diff, (0, 1, 3, 2))                # (b, m, ce, k)

        diff_patch = diff_red[:, :, :, None, :]                     # (b, m, ce, 1, k)
        diff_patch = jnp.broadcast_to(diff_patch, (b, m, ce, e1 * s * e2 * s, k))
        diff_patch = diff_patch.transpose(0, 4, 2, 3, 1)            # (b, k, ce, e1s*e2s, m)
        diff_patch = diff_patch.reshape(b, k * ce, e1 * s, e2 * s, m1, m2)
        padding_sr = tuple(p * s for p in pad)
        diff_patch = patch2im(diff_patch, self.patchsize * s, self.stride * s,
                              padding_sr)
        diff_patch = diff_patch.reshape(b, k * ce, H * s, W * s)

        # --- WITH_SCORE: score already k-major from the kernel (no permute) ---
        score_map = score_km.reshape(b, k, 1, 1, m1, m2)
        score_map = jnp.broadcast_to(score_map, (b, k, e1 * s, e2 * s, m1, m2))
        score_map = patch2im(score_map, self.patchsize * s, self.stride * s,
                             padding_sr)
        score_map = score_map.reshape(b, k, H * s, W * s)

        return score_map, idx_k, diff_patch


# ----------------------------------------------------------------------------
# Pure-JAX reference of the kernel portion (for a correctness check).
# Uses the same bf16 matmul / f32 norm scheme as the kernel.
# ----------------------------------------------------------------------------
def _ref_topk(xe_flat, ye_flat, k):
    xb = xe_flat.astype(jnp.bfloat16)
    yb = ye_flat.astype(jnp.bfloat16)
    D = (-2.0 * jnp.einsum('bme,bne->bmn', yb, xb,
                           preferred_element_type=jnp.float32)
         + jnp.sum(ye_flat ** 2, -1)[:, :, None]
         + jnp.sum(xe_flat ** 2, -1)[:, None, :])
    neg_vals, idx = jax.lax.top_k(-D, k)
    score = jnp.exp(neg_vals / 10.0)                 # exp(-D_topk / 10)
    return (jnp.transpose(score, (0, 2, 1)),                       # (b, k, m)
            jnp.transpose(idx, (0, 2, 1)).astype(jnp.int32))       # (b, k, m)


if __name__ == "__main__":
    key = jax.random.PRNGKey(0)
    k1, k2 = jax.random.split(key)
    # small shapes: batch=2, channels=4, spatial=16x16
    xe = jax.random.normal(k1, (2, 4, 16, 16), dtype=jnp.float32)
    ye = jax.random.normal(k2, (2, 4, 16, 16), dtype=jnp.float32)

    gc = GraphConstruct(scale=2, indexer=None, k=3, patchsize=2, stride=2)
    score_im, idx_k, diff_im = gc(xe, ye)
    jax.block_until_ready((score_im, idx_k, diff_im))

    # correctness check of the Pallas hot path against a pure-JAX reference
    xe_p = im2patch(xe, 2, 2).transpose(0, 4, 5, 1, 2, 3).reshape(2, 64, 16)
    ye_p = im2patch(ye, 2, 2).transpose(0, 4, 5, 1, 2, 3).reshape(2, 64, 16)
    s_pal, i_pal = graph_topk_pallas(xe_p, ye_p, 3)
    s_ref, i_ref = _ref_topk(xe_p, ye_p, 3)
    assert jnp.allclose(s_pal, s_ref, atol=1e-3), "score mismatch"
    # exact index equality is not guaranteed under fp near-ties; require high agreement
    match = jnp.mean((i_pal == i_ref).astype(jnp.float32))
    assert match > 0.97, f"index mismatch (match rate {float(match):.3f})"
    assert score_im.shape == (2, 3, 32, 32)
    assert idx_k.shape == (2, 64, 3)
    assert idx_k.dtype == jnp.int32
    assert diff_im.shape == (2, 12, 32, 32)

    print("KERNEL_OK")
</pallas_src>

<mosaic_0001>
module attributes {stable_mosaic.version = 11 : i64} {
  func.func @_graph_topk_kernel(%arg0: i32, %arg1: i32, %arg2: i32, %arg3: memref<1x64x16xbf16, #tpu.memory_space<vmem>>, %arg4: memref<1x16x128xbf16, #tpu.memory_space<vmem>>, %arg5: memref<1x64x1xf32, #tpu.memory_space<vmem>>, %arg6: memref<1x1x128xf32, #tpu.memory_space<vmem>>, %arg7: memref<1x3x128xf32, #tpu.memory_space<vmem>>, %arg8: memref<1x3x128xi32, #tpu.memory_space<vmem>>, %arg9: memref<3x128xf32, #tpu.memory_space<vmem>>, %arg10: memref<3x128xi32, #tpu.memory_space<vmem>>, %arg11: memref<64x128xi32, #tpu.memory_space<vmem>>) attributes {dimension_semantics = [#tpu.dimension_semantics<parallel>, #tpu.dimension_semantics<parallel>, #tpu.dimension_semantics<arbitrary>], iteration_bounds = array<i64: 2, 1, 1>, scalar_prefetch = 0 : i64, scratch_operands = 3 : i64, tpu.core_type = #tpu.core_type<tc>, window_params = [{transform_indices = @transform_0, window_bounds = array<i64: 1, 64, 16>}, {transform_indices = @transform_1, window_bounds = array<i64: 1, 16, 128>}, {transform_indices = @transform_2, window_bounds = array<i64: 1, 64, 1>}, {transform_indices = @transform_3, window_bounds = array<i64: 1, 1, 128>}, {transform_indices = @transform_4, window_bounds = array<i64: 1, 3, 128>}, {transform_indices = @transform_5, window_bounds = array<i64: 1, 3, 128>}]} {
    %c0_i32 = arith.constant 0 : i32
    %0 = arith.cmpi eq, %arg2, %c0_i32 : i32
    %1 = arith.extui %0 : i1 to i32
    %c0_i32_0 = arith.constant 0 : i32
    %2 = arith.cmpi ne, %1, %c0_i32_0 : i32
    scf.if %2 {
      %cst_49 = arith.constant 0x7F800000 : f32
      %136 = vector.broadcast %cst_49 : f32 to vector<3x128xf32>
      %c0_50 = arith.constant 0 : index
      %c0_51 = arith.constant 0 : index
      %137 = vector.load %arg9[%c0_50, %c0_51] : memref<3x128xf32, #tpu.memory_space<vmem>>, vector<3x128xf32>
      tpu.vector_store %arg9[%c0_50, %c0_51], %136 {strides = array<i32>} : memref<3x128xf32, #tpu.memory_space<vmem>>, vector<3x128xf32>,
      %c0_i32_52 = arith.constant 0 : i32
      %138 = vector.broadcast %c0_i32_52 : i32 to vector<3x128xi32>
      %c0_53 = arith.constant 0 : index
      %c0_54 = arith.constant 0 : index
      %139 = vector.load %arg10[%c0_53, %c0_54] : memref<3x128xi32, #tpu.memory_space<vmem>>, vector<3x128xi32>
      tpu.vector_store %arg10[%c0_53, %c0_54], %138 {strides = array<i32>} : memref<3x128xi32, #tpu.memory_space<vmem>>, vector<3x128xi32>,
      %140 = tpu.iota {dimensions = array<i32: 0>} : vector<64x128xi32>
      %c0_55 = arith.constant 0 : index
      %c0_56 = arith.constant 0 : index
      %141 = vector.load %arg11[%c0_55, %c0_56] : memref<64x128xi32, #tpu.memory_space<vmem>>, vector<64x128xi32>
      tpu.vector_store %arg11[%c0_55, %c0_56], %140 {strides = array<i32>} : memref<64x128xi32, #tpu.memory_space<vmem>>, vector<64x128xi32>,
    } else {
    }
    %c0 = arith.constant 0 : index
    %c0_1 = arith.constant 0 : index
    %c0_2 = arith.constant 0 : index
    %3 = vector.load %arg3[%c0, %c0_1, %c0_2] : memref<1x64x16xbf16, #tpu.memory_space<vmem>>, vector<1x64x16xbf16>
    %4 = vector.shape_cast %3 : vector<1x64x16xbf16> to vector<64x16xbf16>
    %c0_3 = arith.constant 0 : index
    %c0_4 = arith.constant 0 : index
    %c0_5 = arith.constant 0 : index
    %5 = vector.load %arg4[%c0_3, %c0_4, %c0_5] : memref<1x16x128xbf16, #tpu.memory_space<vmem>>, vector<1x16x128xbf16>
    %6 = vector.shape_cast %5 : vector<1x16x128xbf16> to vector<16x128xbf16>
    %c0_6 = arith.constant 0 : index
    %c0_7 = arith.constant 0 : index
    %c0_8 = arith.constant 0 : index
    %7 = vector.load %arg5[%c0_6, %c0_7, %c0_8] : memref<1x64x1xf32, #tpu.memory_space<vmem>>, vector<1x64x1xf32>
    %8 = vector.shape_cast %7 : vector<1x64x1xf32> to vector<64x1xf32>
    %cst = arith.constant dense<0.000000e+00> : vector<64x128xf32>
    %9 = tpu.matmul %4, %6, %cst {dimension_numbers = #tpu.dot_dimension_numbers<[1], [0], [0], [1], [0, 0, 1, 1], [], []>} : vector<64x16xbf16>, vector<16x128xbf16>, vector<64x128xf32> -> vector<64x128xf32>
    %cst_9 = arith.constant -2.000000e+00 : f32
    %10 = vector.broadcast %cst_9 : f32 to vector<64x128xf32>
    %11 = arith.mulf %10, %9 : vector<64x128xf32>
    %12 = vector.broadcast %8 : vector<64x1xf32> to vector<64x128xf32>
    %13 = arith.addf %11, %12 : vector<64x128xf32>
    %c0_10 = arith.constant 0 : index
    %c0_11 = arith.constant 0 : index
    %14 = vector.load %arg11[%c0_10, %c0_11] : memref<64x128xi32, #tpu.memory_space<vmem>>, vector<64x128xi32>
    %c0_12 = arith.constant 0 : index
    %c0_13 = arith.constant 0 : index
    %15 = vector.load %arg9[%c0_12, %c0_13] : memref<3x128xf32, #tpu.memory_space<vmem>>, vector<3x128xf32>
    %c0_14 = arith.constant 0 : index
    %c0_15 = arith.constant 0 : index
    %16 = vector.load %arg10[%c0_14, %c0_15] : memref<3x128xi32, #tpu.memory_space<vmem>>, vector<3x128xi32>
    %c64_i32 = arith.constant 64 : i32
    %17 = arith.muli %arg2, %c64_i32 : i32
    %18 = tpu.iota {dimensions = array<i32: 0>} : vector<3x128xi32>
    %cst_16 = arith.constant 0.000000e+00 : f32
    %19 = vector.broadcast %cst_16 : f32 to vector<3x128xf32>
    %c0_i32_17 = arith.constant 0 : i32
    %20 = vector.broadcast %c0_i32_17 : i32 to vector<3x128xi32>
    %cst_18 = arith.constant dense<0x7F800000> : vector<128xf32>
    %21 = vector.multi_reduction <minimumf>, %13, %cst_18 [0] : vector<64x128xf32> to vector<128xf32>
    %22 = vector.shape_cast %21 : vector<128xf32> to vector<1x128xf32>
    %cst_19 = arith.constant dense<0x7F800000> : vector<128xf32>
    %23 = vector.multi_reduction <minimumf>, %15, %cst_19 [0] : vector<3x128xf32> to vector<128xf32>
    %24 = vector.shape_cast %23 : vector<128xf32> to vector<1x128xf32>
    %25 = arith.minimumf %22, %24 : vector<1x128xf32>
    %26 = vector.broadcast %25 : vector<1x128xf32> to vector<64x128xf32>
    %27 = arith.cmpf ole, %13, %26 : vector<64x128xf32>
    %28 = vector.broadcast %25 : vector<1x128xf32> to vector<3x128xf32>
    %29 = arith.cmpf ole, %15, %28 : vector<3x128xf32>
    %c64_i32_20 = arith.constant 64 : i32
    %30 = vector.broadcast %c64_i32_20 : i32 to vector<64x128xi32>
    %31 = arith.select %27, %14, %30 : vector<64x128xi1>, vector<64x128xi32>
    %cst_21 = arith.constant dense<2147483647> : vector<128xi32>
    %32 = vector.multi_reduction <minsi>, %31, %cst_21 [0] : vector<64x128xi32> to vector<128xi32>
    %33 = vector.shape_cast %32 : vector<128xi32> to vector<1x128xi32>
    %34 = vector.broadcast %17 : i32 to vector<1x128xi32>
    %35 = arith.addi %33, %34 : vector<1x128xi32>
    %c2147483647_i32 = arith.constant 2147483647 : i32
    %36 = vector.broadcast %c2147483647_i32 : i32 to vector<3x128xi32>
    %37 = arith.select %29, %16, %36 : vector<3x128xi1>, vector<3x128xi32>
    %cst_22 = arith.constant dense<2147483647> : vector<128xi32>
    %38 = vector.multi_reduction <minsi>, %37, %cst_22 [0] : vector<3x128xi32> to vector<128xi32>
    %39 = vector.shape_cast %38 : vector<128xi32> to vector<1x128xi32>
    %40 = arith.minsi %35, %39 : vector<1x128xi32>
    %c0_i32_23 = arith.constant 0 : i32
    %41 = vector.broadcast %c0_i32_23 : i32 to vector<3x128xi32>
    %42 = arith.cmpi eq, %18, %41 : vector<3x128xi32>
    %43 = vector.shape_cast %25 : vector<1x128xf32> to vector<1x128xf32>
    %44 = vector.broadcast %43 : vector<1x128xf32> to vector<3x128xf32>
    %45 = arith.select %42, %44, %19 : vector<3x128xi1>, vector<3x128xf32>
    %c0_i32_24 = arith.constant 0 : i32
    %46 = vector.broadcast %c0_i32_24 : i32 to vector<3x128xi32>
    %47 = arith.cmpi eq, %18, %46 : vector<3x128xi32>
    %48 = vector.shape_cast %40 : vector<1x128xi32> to vector<1x128xi32>
    %49 = vector.broadcast %48 : vector<1x128xi32> to vector<3x128xi32>
    %50 = arith.select %47, %49, %20 : vector<3x128xi1>, vector<3x128xi32>
    %51 = vector.broadcast %17 : i32 to vector<1x128xi32>
    %52 = arith.subi %40, %51 : vector<1x128xi32>
    %53 = vector.broadcast %52 : vector<1x128xi32> to vector<64x128xi32>
    %54 = arith.cmpi eq, %14, %53 : vector<64x128xi32>
    %cst_25 = arith.constant 0x7F800000 : f32
    %55 = vector.broadcast %cst_25 : f32 to vector<64x128xf32>
    %56 = arith.select %54, %55, %13 : vector<64x128xi1>, vector<64x128xf32>
    %57 = vector.broadcast %40 : vector<1x128xi32> to vector<3x128xi32>
    %58 = arith.cmpi eq, %16, %57 : vector<3x128xi32>
    %cst_26 = arith.constant 0x7F800000 : f32
    %59 = vector.broadcast %cst_26 : f32 to vector<3x128xf32>
    %60 = arith.select %58, %59, %15 : vector<3x128xi1>, vector<3x128xf32>
    %cst_27 = arith.constant dense<0x7F800000> : vector<128xf32>
    %61 = vector.multi_reduction <minimumf>, %56, %cst_27 [0] : vector<64x128xf32> to vector<128xf32>
    %62 = vector.shape_cast %61 : vector<128xf32> to vector<1x128xf32>
    %cst_28 = arith.constant dense<0x7F800000> : vector<128xf32>
    %63 = vector.multi_reduction <minimumf>, %60, %cst_28 [0] : vector<3x128xf32> to vector<128xf32>
    %64 = vector.shape_cast %63 : vector<128xf32> to vector<1x128xf32>
    %65 = arith.minimumf %62, %64 : vector<1x128xf32>
    %66 = vector.broadcast %65 : vector<1x128xf32> to vector<64x128xf32>
    %67 = arith.cmpf ole, %56, %66 : vector<64x128xf32>
    %68 = vector.broadcast %65 : vector<1x128xf32> to vector<3x128xf32>
    %69 = arith.cmpf ole, %60, %68 : vector<3x128xf32>
    %c64_i32_29 = arith.constant 64 : i32
    %70 = vector.broadcast %c64_i32_29 : i32 to vector<64x128xi32>
    %71 = arith.select %67, %14, %70 : vector<64x128xi1>, vector<64x128xi32>
    %cst_30 = arith.constant dense<2147483647> : vector<128xi32>
    %72 = vector.multi_reduction <minsi>, %71, %cst_30 [0] : vector<64x128xi32> to vector<128xi32>
    %73 = vector.shape_cast %72 : vector<128xi32> to vector<1x128xi32>
    %74 = vector.broadcast %17 : i32 to vector<1x128xi32>
    %75 = arith.addi %73, %74 : vector<1x128xi32>
    %c2147483647_i32_31 = arith.constant 2147483647 : i32
    %76 = vector.broadcast %c2147483647_i32_31 : i32 to vector<3x128xi32>
    %77 = arith.select %69, %16, %76 : vector<3x128xi1>, vector<3x128xi32>
    %cst_32 = arith.constant dense<2147483647> : vector<128xi32>
    %78 = vector.multi_reduction <minsi>, %77, %cst_32 [0] : vector<3x128xi32> to vector<128xi32>
    %79 = vector.shape_cast %78 : vector<128xi32> to vector<1x128xi32>
    %80 = arith.minsi %75, %79 : vector<1x128xi32>
    %c1_i32 = arith.constant 1 : i32
    %81 = vector.broadcast %c1_i32 : i32 to vector<3x128xi32>
    %82 = arith.cmpi eq, %18, %81 : vector<3x128xi32>
    %83 = vector.shape_cast %65 : vector<1x128xf32> to vector<1x128xf32>
    %84 = vector.broadcast %83 : vector<1x128xf32> to vector<3x128xf32>
    %85 = arith.select %82, %84, %45 : vector<3x128xi1>, vector<3x128xf32>
    %c1_i32_33 = arith.constant 1 : i32
    %86 = vector.broadcast %c1_i32_33 : i32 to vector<3x128xi32>
    %87 = arith.cmpi eq, %18, %86 : vector<3x128xi32>
    %88 = vector.shape_cast %80 : vector<1x128xi32> to vector<1x128xi32>
    %89 = vector.broadcast %88 : vector<1x128xi32> to vector<3x128xi32>
    %90 = arith.select %87, %89, %50 : vector<3x128xi1>, vector<3x128xi32>
    %91 = vector.broadcast %17 : i32 to vector<1x128xi32>
    %92 = arith.subi %80, %91 : vector<1x128xi32>
    %93 = vector.broadcast %92 : vector<1x128xi32> to vector<64x128xi32>
    %94 = arith.cmpi eq, %14, %93 : vector<64x128xi32>
    %cst_34 = arith.constant 0x7F800000 : f32
    %95 = vector.broadcast %cst_34 : f32 to vector<64x128xf32>
    %96 = arith.select %94, %95, %56 : vector<64x128xi1>, vector<64x128xf32>
    %97 = vector.broadcast %80 : vector<1x128xi32> to vector<3x128xi32>
    %98 = arith.cmpi eq, %16, %97 : vector<3x128xi32>
    %cst_35 = arith.constant 0x7F800000 : f32
    %99 = vector.broadcast %cst_35 : f32 to vector<3x128xf32>
    %100 = arith.select %98, %99, %60 : vector<3x128xi1>, vector<3x128xf32>
    %cst_36 = arith.constant dense<0x7F800000> : vector<128xf32>
    %101 = vector.multi_reduction <minimumf>, %96, %cst_36 [0] : vector<64x128xf32> to vector<128xf32>
    %102 = vector.shape_cast %101 : vector<128xf32> to vector<1x128xf32>
    %cst_37 = arith.constant dense<0x7F800000> : vector<128xf32>
    %103 = vector.multi_reduction <minimumf>, %100, %cst_37 [0] : vector<3x128xf32> to vector<128xf32>
    %104 = vector.shape_cast %103 : vector<128xf32> to vector<1x128xf32>
    %105 = arith.minimumf %102, %104 : vector<1x128xf32>
    %106 = vector.broadcast %105 : vector<1x128xf32> to vector<64x128xf32>
    %107 = arith.cmpf ole, %96, %106 : vector<64x128xf32>
    %108 = vector.broadcast %105 : vector<1x128xf32> to vector<3x128xf32>
    %109 = arith.cmpf ole, %100, %108 : vector<3x128xf32>
    %c64_i32_38 = arith.constant 64 : i32
    %110 = vector.broadcast %c64_i32_38 : i32 to vector<64x128xi32>
    %111 = arith.select %107, %14, %110 : vector<64x128xi1>, vector<64x128xi32>
    %cst_39 = arith.constant dense<2147483647> : vector<128xi32>
    %112 = vector.multi_reduction <minsi>, %111, %cst_39 [0] : vector<64x128xi32> to vector<128xi32>
    %113 = vector.shape_cast %112 : vector<128xi32> to vector<1x128xi32>
    %114 = vector.broadcast %17 : i32 to vector<1x128xi32>
    %115 = arith.addi %113, %114 : vector<1x128xi32>
    %c2147483647_i32_40 = arith.constant 2147483647 : i32
    %116 = vector.broadcast %c2147483647_i32_40 : i32 to vector<3x128xi32>
    %117 = arith.select %109, %16, %116 : vector<3x128xi1>, vector<3x128xi32>
    %cst_41 = arith.constant dense<2147483647> : vector<128xi32>
    %118 = vector.multi_reduction <minsi>, %117, %cst_41 [0] : vector<3x128xi32> to vector<128xi32>
    %119 = vector.shape_cast %118 : vector<128xi32> to vector<1x128xi32>
    %120 = arith.minsi %115, %119 : vector<1x128xi32>
    %c2_i32 = arith.constant 2 : i32
    %121 = vector.broadcast %c2_i32 : i32 to vector<3x128xi32>
    %122 = arith.cmpi eq, %18, %121 : vector<3x128xi32>
    %123 = vector.shape_cast %105 : vector<1x128xf32> to vector<1x128xf32>
    %124 = vector.broadcast %123 : vector<1x128xf32> to vector<3x128xf32>
    %125 = arith.select %122, %124, %85 : vector<3x128xi1>, vector<3x128xf32>
    %c2_i32_42 = arith.constant 2 : i32
    %126 = vector.broadcast %c2_i32_42 : i32 to vector<3x128xi32>
    %127 = arith.cmpi eq, %18, %126 : vector<3x128xi32>
    %128 = vector.shape_cast %120 : vector<1x128xi32> to vector<1x128xi32>
    %129 = vector.broadcast %128 : vector<1x128xi32> to vector<3x128xi32>
    %130 = arith.select %127, %129, %90 : vector<3x128xi1>, vector<3x128xi32>
    %c0_43 = arith.constant 0 : index
    %c0_44 = arith.constant 0 : index
    %131 = vector.load %arg9[%c0_43, %c0_44] : memref<3x128xf32, #tpu.memory_space<vmem>>, vector<3x128xf32>
    tpu.vector_store %arg9[%c0_43, %c0_44], %125 {strides = array<i32>} : memref<3x128xf32, #tpu.memory_space<vmem>>, vector<3x128xf32>,
    %c0_45 = arith.constant 0 : index
    %c0_46 = arith.constant 0 : index
    %132 = vector.load %arg10[%c0_45, %c0_46] : memref<3x128xi32, #tpu.memory_space<vmem>>, vector<3x128xi32>
    tpu.vector_store %arg10[%c0_45, %c0_46], %130 {strides = array<i32>} : memref<3x128xi32, #tpu.memory_space<vmem>>, vector<3x128xi32>,
    %c0_i32_47 = arith.constant 0 : i32
    %133 = arith.cmpi eq, %arg2, %c0_i32_47 : i32
    %134 = arith.extui %133 : i1 to i32
    %c0_i32_48 = arith.constant 0 : i32
    %135 = arith.cmpi ne, %134, %c0_i32_48 : i32
    scf.if %135 {
      %c0_49 = arith.constant 0 : index
      %c0_50 = arith.constant 0 : index
      %c0_51 = arith.constant 0 : index
      %136 = vector.load %arg6[%c0_49, %c0_50, %c0_51] : memref<1x1x128xf32, #tpu.memory_space<vmem>>, vector<1x1x128xf32>
      %137 = vector.shape_cast %136 : vector<1x1x128xf32> to vector<1x128xf32>
      %138 = vector.broadcast %137 : vector<1x128xf32> to vector<3x128xf32>
      %139 = arith.addf %125, %138 : vector<3x128xf32>
      %cst_52 = arith.constant 0.000000e+00 : f32
      %140 = vector.broadcast %cst_52 : f32 to vector<3x128xf32>
      %141 = arith.subf %140, %139 : vector<3x128xf32>
      %cst_53 = arith.constant 1.000000e+01 : f32
      %142 = vector.broadcast %cst_53 : f32 to vector<3x128xf32>
      %143 = arith.divf %141, %142 : vector<3x128xf32>
      %144 = math.exp %143 : vector<3x128xf32>
      %c0_54 = arith.constant 0 : index
      %c0_55 = arith.constant 0 : index
      %c0_56 = arith.constant 0 : index
      %145 = vector.load %arg7[%c0_54, %c0_55, %c0_56] : memref<1x3x128xf32, #tpu.memory_space<vmem>>, vector<1x3x128xf32>
      %146 = vector.shape_cast %145 : vector<1x3x128xf32> to vector<3x128xf32>
      %147 = vector.shape_cast %144 : vector<3x128xf32> to vector<1x3x128xf32>
      tpu.vector_store %arg7[%c0_54, %c0_55, %c0_56], %147 {strides = array<i32>} : memref<1x3x128xf32, #tpu.memory_space<vmem>>, vector<1x3x128xf32>,
      %c0_57 = arith.constant 0 : index
      %c0_58 = arith.constant 0 : index
      %c0_59 = arith.constant 0 : index
      %148 = vector.load %arg8[%c0_57, %c0_58, %c0_59] : memref<1x3x128xi32, #tpu.memory_space<vmem>>, vector<1x3x128xi32>
      %149 = vector.shape_cast %148 : vector<1x3x128xi32> to vector<3x128xi32>
      %150 = vector.shape_cast %130 : vector<3x128xi32> to vector<1x3x128xi32>
      tpu.vector_store %arg8[%c0_57, %c0_58, %c0_59], %150 {strides = array<i32>} : memref<1x3x128xi32, #tpu.memory_space<vmem>>, vector<1x3x128xi32>,
    } else {
    }
    return
  }
  func.func @transform_0(%arg0: i32, %arg1: i32, %arg2: i32) -> (i32, i32, i32) {
    %c0_i32 = arith.constant 0 : i32
    %c0_i32_0 = arith.constant 0 : i32
    return %arg0, %arg2, %c0_i32 : i32, i32, i32
  }
  func.func @transform_1(%arg0: i32, %arg1: i32, %arg2: i32) -> (i32, i32, i32) {
    %c0_i32 = arith.constant 0 : i32
    %c0_i32_0 = arith.constant 0 : i32
    return %arg0, %c0_i32, %arg1 : i32, i32, i32
  }
  func.func @transform_2(%arg0: i32, %arg1: i32, %arg2: i32) -> (i32, i32, i32) {
    %c0_i32 = arith.constant 0 : i32
    %c0_i32_0 = arith.constant 0 : i32
    return %arg0, %arg2, %c0_i32 : i32, i32, i32
  }
  func.func @transform_3(%arg0: i32, %arg1: i32, %arg2: i32) -> (i32, i32, i32) {
    %c0_i32 = arith.constant 0 : i32
    %c0_i32_0 = arith.constant 0 : i32
    return %arg0, %c0_i32, %arg1 : i32, i32, i32
  }
  func.func @transform_4(%arg0: i32, %arg1: i32, %arg2: i32) -> (i32, i32, i32) {
    %c0_i32 = arith.constant 0 : i32
    %c0_i32_0 = arith.constant 0 : i32
    return %arg0, %c0_i32, %arg1 : i32, i32, i32
  }
  func.func @transform_5(%arg0: i32, %arg1: i32, %arg2: i32) -> (i32, i32, i32) {
    %c0_i32 = arith.constant 0 : i32
    %c0_i32_0 = arith.constant 0 : i32
    return %arg0, %c0_i32, %arg1 : i32, i32, i32
  }
}

</mosaic_0001>

<llo_original>
// kernel: tpu_custom_call.1
$region0: #{tpu_custom_call.1}
  #allocation0 [shape = 'u32[]', space=smem, size = 0x4, offset = 0x4, fixed_abs, tag = 'smem constant byte address 0x4 - core index']
  #allocation1 [shape = 'u32[72,128]{1,0:T(1,128)}', space=vmem, size = 0x9000, scoped, tag = 'internal scratch']
  #allocation2 [shape = 'f32[3,128]{1,0:T(4,128)}', space=vmem, size = 0x800, scoped, tag = 'scratch operand']
  #allocation3 [shape = 's32[3,128]{1,0:T(4,128)}', space=vmem, size = 0x800, scoped, tag = 'scratch operand']
  #allocation4 [shape = 's32[64,128]{1,0:T(8,128)}', space=vmem, size = 0x8000, scoped, tag = 'scratch operand']
  %s0 = inlined_call_operand.vmem [shape: bf16[2,64,16], index: 0, kind: input, shape index: {}]
  %s1 = inlined_call_operand.vmem [shape: bf16[2,16,128], index: 1, kind: input, shape index: {}]
  %s2 = inlined_call_operand.vmem [shape: f32[2,64,1], index: 2, kind: input, shape index: {}]
  %s3 = inlined_call_operand.vmem [shape: f32[2,1,128], index: 3, kind: input, shape index: {}]
  %s4 = inlined_call_operand.vmem [shape: f32[2,3,128], index: 4, kind: output, shape index: {0}]
  %s5 = inlined_call_operand.vmem [shape: s32[2,3,128], index: 5, kind: output, shape index: {1}]
  %6 = xla_tuple %s4, %s5
  %s7 = sld [smem:[#allocation0]]
  $region65: #{tpu_custom_call.1} parent=0
    _
  %s9 = ssub.s32 1, %s7
  %s10 = scalar_select 0, %s9, %s7
  loop: start=0, step=1, limit=4
  $region2: #{tpu_custom_call.1} parent=0 // loop_pre_header
    _
  $region3: #{tpu_custom_call.1} parent=0 // loop_header
    %s12 = sphi 0, %s16
    %p13 = scmp.ge.s32.totalorder %s12, 4
    %s19 = sphi 0, %s38
    %s20 = sphi 0, %s34
    %s21 = sphi 0, %s30
    %s22 = sphi 0, %s19
    %s23 = sphi 0, %s20
    %s24 = sphi 0, %s21
    %s25 = sphi 0, %s22
    %s26 = sphi 0, %s23
    %s27 = sphi 0, %s24
    %s43 = sphi 0, %s45
    %s46 = sphi 0, %s43
    %s47 = sphi 0, %s46
    %s63 = sphi 0, %s47
    %s71 = sphi 0, %s73
    %s74 = sphi 0, %s71
    %s75 = sphi 0, %s74
    %s91 = sphi 0, %s75
    %s99 = sphi 0, %s101
    %s102 = sphi 0, %s99
    %s103 = sphi 0, %s102
    %s119 = sphi 0, %s103
    %s127 = sphi 0, %s129
    %s130 = sphi 0, %s127
    %s131 = sphi 0, %s130
    %s147 = sphi 0, %s131
    %s155 = sphi 0, %s157
    %s158 = sphi 0, %s155
    %s159 = sphi 0, %s158
    %s175 = sphi 0, %s159
    %s183 = sphi 0, %s185
    %s186 = sphi 0, %s183
    %s187 = sphi 0, %s186
    %s203 = sphi 0, %s187
  $region4: #{tpu_custom_call.1} parent=0 // loop_header_branch
    %15 = sbr.rel (%p13) target = $region8
  $region5: #{tpu_custom_call.1} parent=0 // loop_body
    %s17 = ssub.s32 %s12, 1
    %s18 = ssub.s32 %s12, 2
    %s28 = sadd.s32 1, %s21
    %p29 = scmp.ge.s32.totalorder %s28, 1
    %s30 = scalar_select %p29, 0, %s28
    %s31 = sadd.s32 1, %s20
    %s32 = scalar_select %p29, %s31, %s20
    %p33 = scmp.ge.s32.totalorder %s32, 1
    %s34 = scalar_select %p33, 0, %s32
    %s35 = sadd.s32 1, %s19
    %s36 = scalar_select %p33, %s35, %s19
    %p37 = scmp.ge.s32.totalorder %s36, 2
    %s38 = scalar_select %p37, 0, %s36
    %s39 = ssub.s32 %s19, %s38
    %s40 = ssub.s32 %s21, %s30
    %s41 = sor.u32 %s39, %s40
    %p42 = scmp.eq.s32.totalorder %s41, 0
    %s44 = sadd.s32 %s43, 1
    %s45 = scalar_select %p42, %s43, %s44
    %p48 = pneg %p42
    %p49 = scmp.eq.s32.totalorder %s12, 1
    %p50 = por %p48, %p49
    %p51 = scmp.ne.s32.totalorder %s43, %s46
    %p52 = scmp.eq.s32.totalorder %s12, 0
    %p53 = por %p51, %p52
    %p54 = scmp.ne.s32.totalorder %s43, %s46
    %p55 = scmp.eq.s32.totalorder %s17, 1
    %p56 = por %p54, %p55
    %p57 = scmp.ne.s32.totalorder %s46, %s47
    %p58 = scmp.eq.s32.totalorder %s17, 0
    %p59 = por %p57, %p58
    %p60 = scmp.ne.s32.totalorder %s46, %s47
    %p61 = scmp.eq.s32.totalorder %s18, 1
    %p62 = por %p60, %p61
    %p64 = scmp.ne.s32.totalorder %s47, %s63
    %p65 = scmp.eq.s32.totalorder %s18, 0
    %p66 = por %p64, %p65
    %s67 = ssub.s32 %s19, %s38
    %s68 = ssub.s32 %s20, %s34
    %s69 = sor.u32 %s67, %s68
    %p70 = scmp.eq.s32.totalorder %s69, 0
    %s72 = sadd.s32 %s71, 1
    %s73 = scalar_select %p70, %s71, %s72
    %p76 = pneg %p70
    %p77 = scmp.eq.s32.totalorder %s12, 1
    %p78 = por %p76, %p77
    %p79 = scmp.ne.s32.totalorder %s71, %s74
    %p80 = scmp.eq.s32.totalorder %s12, 0
    %p81 = por %p79, %p80
    %p82 = scmp.ne.s32.totalorder %s71, %s74
    %p83 = scmp.eq.s32.totalorder %s17, 1
    %p84 = por %p82, %p83
    %p85 = scmp.ne.s32.totalorder %s74, %s75
    %p86 = scmp.eq.s32.totalorder %s17, 0
    %p87 = por %p85, %p86
    %p88 = scmp.ne.s32.totalorder %s74, %s75
    %p89 = scmp.eq.s32.totalorder %s18, 1
    %p90 = por %p88, %p89
    %p92 = scmp.ne.s32.totalorder %s75, %s91
    %p93 = scmp.eq.s32.totalorder %s18, 0
    %p94 = por %p92, %p93
    %s95 = ssub.s32 %s19, %s38
    %s96 = ssub.s32 %s21, %s30
    %s97 = sor.u32 %s95, %s96
    %p98 = scmp.eq.s32.totalorder %s97, 0
    %s100 = sadd.s32 %s99, 1
    %s101 = scalar_select %p98, %s99, %s100
    %p104 = pneg %p98
    %p105 = scmp.eq.s32.totalorder %s12, 1
    %p106 = por %p104, %p105
    %p107 = scmp.ne.s32.totalorder %s99, %s102
    %p108 = scmp.eq.s32.totalorder %s12, 0
    %p109 = por %p107, %p108
    %p110 = scmp.ne.s32.totalorder %s99, %s102
    %p111 = scmp.eq.s32.totalorder %s17, 1
    %p112 = por %p110, %p111
    %p113 = scmp.ne.s32.totalorder %s102, %s103
    %p114 = scmp.eq.s32.totalorder %s17, 0
    %p115 = por %p113, %p114
    %p116 = scmp.ne.s32.totalorder %s102, %s103
    %p117 = scmp.eq.s32.totalorder %s18, 1
    %p118 = por %p116, %p117
    %p120 = scmp.ne.s32.totalorder %s103, %s119
    %p121 = scmp.eq.s32.totalorder %s18, 0
    %p122 = por %p120, %p121
    %s123 = ssub.s32 %s19, %s38
    %s124 = ssub.s32 %s20, %s34
    %s125 = sor.u32 %s123, %s124
    %p126 = scmp.eq.s32.totalorder %s125, 0
    %s128 = sadd.s32 %s127, 1
    %s129 = scalar_select %p126, %s127, %s128
    %p132 = pneg %p126
    %p133 = scmp.eq.s32.totalorder %s12, 1
    %p134 = por %p132, %p133
    %p135 = scmp.ne.s32.totalorder %s127, %s130
    %p136 = scmp.eq.s32.totalorder %s12, 0
    %p137 = por %p135, %p136
    %p138 = scmp.ne.s32.totalorder %s127, %s130
    %p139 = scmp.eq.s32.totalorder %s17, 1
    %p140 = por %p138, %p139
    %p141 = scmp.ne.s32.totalorder %s130, %s131
    %p142 = scmp.eq.s32.totalorder %s17, 0
    %p143 = por %p141, %p142
    %p144 = scmp.ne.s32.totalorder %s130, %s131
    %p145 = scmp.eq.s32.totalorder %s18, 1
    %p146 = por %p144, %p145
    %p148 = scmp.ne.s32.totalorder %s131, %s147
    %p149 = scmp.eq.s32.totalorder %s18, 0
    %p150 = por %p148, %p149
    %s151 = ssub.s32 %s19, %s38
    %s152 = ssub.s32 %s20, %s34
    %s153 = sor.u32 %s151, %s152
    %p154 = scmp.eq.s32.totalorder %s153, 0
    %s156 = sadd.s32 %s155, 1
    %s157 = scalar_select %p154, %s155, %s156
    %p160 = pneg %p154
    %p161 = scmp.eq.s32.totalorder %s12, 1
    %p162 = por %p160, %p161
    %p163 = scmp.ne.s32.totalorder %s155, %s158
    %p164 = scmp.eq.s32.totalorder %s12, 0
    %p165 = por %p163, %p164
    %p166 = scmp.ne.s32.totalorder %s155, %s158
    %p167 = scmp.eq.s32.totalorder %s17, 1
    %p168 = por %p166, %p167
    %p169 = scmp.ne.s32.totalorder %s158, %s159
    %p170 = scmp.eq.s32.totalorder %s17, 0
    %p171 = por %p169, %p170
    %p172 = scmp.ne.s32.totalorder %s158, %s159
    %p173 = scmp.eq.s32.totalorder %s18, 1
    %p174 = por %p172, %p173
    %p176 = scmp.ne.s32.totalorder %s159, %s175
    %p177 = scmp.eq.s32.totalorder %s18, 0
    %p178 = por %p176, %p177
    %s179 = ssub.s32 %s19, %s38
    %s180 = ssub.s32 %s20, %s34
    %s181 = sor.u32 %s179, %s180
    %p182 = scmp.eq.s32.totalorder %s181, 0
    %s184 = sadd.s32 %s183, 1
    %s185 = scalar_select %p182, %s183, %s184
    %p188 = pneg %p182
    %p189 = scmp.eq.s32.totalorder %s12, 1
    %p190 = por %p188, %p189
    %p191 = scmp.ne.s32.totalorder %s183, %s186
    %p192 = scmp.eq.s32.totalorder %s12, 0
    %p193 = por %p191, %p192
    %p194 = scmp.ne.s32.totalorder %s183, %s186
    %p195 = scmp.eq.s32.totalorder %s17, 1
    %p196 = por %p194, %p195
    %p197 = scmp.ne.s32.totalorder %s186, %s187
    %p198 = scmp.eq.s32.totalorder %s17, 0
    %p199 = por %p197, %p198
    %p200 = scmp.ne.s32.totalorder %s186, %s187
    %p201 = scmp.eq.s32.totalorder %s18, 1
    %p202 = por %p200, %p201
    %p204 = scmp.ne.s32.totalorder %s187, %s203
    %p205 = scmp.eq.s32.totalorder %s18, 0
    %p206 = por %p204, %p205
    %p207 = scmp.le.s32.totalorder 1, %s12
    %p208 = scmp.lt.s32.totalorder %s12, 3
    %p209 = pnand %p207, %p208
    %p210 = pneg %p209
    // Predicated region
    $region9: #{tpu_custom_call.1} parent=5 // pred_check
      _
    $region10: #{tpu_custom_call.1} parent=5 // pred_check_branch
      %212 = sbr.rel (%p209) target = $region12
    $region11: #{tpu_custom_call.1} parent=5 // pred_region
      %s213 = ssub.s32 %s12, 1
    $region12: #{tpu_custom_call.1} parent=5 // pred_fallthru
      _
    %p214 = scmp.lt.s32.totalorder %s12, 2
    // Predicated region
    $region13: #{tpu_custom_call.1} parent=5 // pred_check
      %p215 = pneg %p214
    $region14: #{tpu_custom_call.1} parent=5 // pred_check_branch
      %217 = sbr.rel (%p215) target = $region16
    $region15: #{tpu_custom_call.1} parent=5 // pred_region
      // Predicated region
      $region17: #{tpu_custom_call.1} parent=15 // pred_check
        %p218 = pneg %p53
      $region18: #{tpu_custom_call.1} parent=15 // pred_check_branch
        %220 = sbr.rel (%p218) target = $region20
      $region19: #{tpu_custom_call.1} parent=15 // pred_region
        %s221 = smul.u32 8, %s21
        %p222 = scmp.lt.s32.totalorder %s19, 1
        %s223 = scalar_select %p222, %s19, 1
        %p224 = scmp.lt.s32.totalorder %s221, 7
        %s225 = scalar_select %p224, %s221, 7
        %s226 = smul.addr %s223, 8
        %s227 = sadd.s32 %s225, %s226
        %s228 = smul.addr %s227, 4
        %s229 = scalar_lea.vmem %s0, %s228
        %s230 = smul.u32 8, %s21
      $region20: #{tpu_custom_call.1} parent=15 // pred_fallthru
        _
      // Predicated region
      $region21: #{tpu_custom_call.1} parent=15 // pred_check
        %p231 = pneg %p81
      $region22: #{tpu_custom_call.1} parent=15 // pred_check_branch
        %233 = sbr.rel (%p231) target = $region24
      $region23: #{tpu_custom_call.1} parent=15 // pred_region
        %p234 = scmp.lt.s32.totalorder %s19, 1
        %s235 = scalar_select %p234, %s19, 1
        %p236 = scmp.lt.s32.totalorder %s20, 0
        %s237 = scalar_select %p236, %s20, 0
        %s238 = smul.addr %s235, 2
        %s239 = sadd.s32 %s237, %s238
        %s240 = smul.addr %s239, 4
        %s241 = scalar_lea.vmem %s1, %s240
      $region24: #{tpu_custom_call.1} parent=15 // pred_fallthru
        _
      // Predicated region
      $region25: #{tpu_custom_call.1} parent=15 // pred_check
        %p242 = pneg %p109
      $region26: #{tpu_custom_call.1} parent=15 // pred_check_branch
        %244 = sbr.rel (%p242) target = $region28
      $region27: #{tpu_custom_call.1} parent=15 // pred_region
        %s245 = smul.u32 8, %s21
        %p246 = scmp.lt.s32.totalorder %s19, 1
        %s247 = scalar_select %p246, %s19, 1
        %p248 = scmp.lt.s32.totalorder %s245, 7
        %s249 = scalar_select %p248, %s245, 7
        %s250 = smul.addr %s247, 8
        %s251 = sadd.s32 %s249, %s250
        %s252 = smul.addr %s251, 8
        %s253 = scalar_lea.vmem %s2, %s252
        %s254 = smul.u32 8, %s21
      $region28: #{tpu_custom_call.1} parent=15 // pred_fallthru
        _
      // Predicated region
      $region29: #{tpu_custom_call.1} parent=15 // pred_check
        %p255 = pneg %p137
      $region30: #{tpu_custom_call.1} parent=15 // pred_check_branch
        %257 = sbr.rel (%p255) target = $region32
      $region31: #{tpu_custom_call.1} parent=15 // pred_region
        %p258 = scmp.lt.s32.totalorder %s19, 1
        %s259 = scalar_select %p258, %s19, 1
        %p260 = scmp.lt.s32.totalorder %s20, 0
        %s261 = scalar_select %p260, %s20, 0
        %s262 = sadd.s32 %s261, %s259
        %s263 = scalar_lea.vmem %s3, %s262
      $region32: #{tpu_custom_call.1} parent=15 // pred_fallthru
        _
    $region16: #{tpu_custom_call.1} parent=5 // pred_fallthru
      _
    %p264 = scmp.le.s32.totalorder 1, %s12
    %p265 = scmp.lt.s32.totalorder %s12, 3
    %p266 = pnand %p264, %p265
    %p267 = pneg %p266
    // Predicated region
    $region33: #{tpu_custom_call.1} parent=5 // pred_check
      _
    $region34: #{tpu_custom_call.1} parent=5 // pred_check_branch
      %269 = sbr.rel (%p266) target = $region36
    $region35: #{tpu_custom_call.1} parent=5 // pred_region
      %s270 = ssub.s32 %s12, 1
      %s271 = smul.u32 8, %s24
      %p272 = scmp.lt.s32.totalorder %s22, 1
      %s273 = scalar_select %p272, %s22, 1
      %p274 = scmp.lt.s32.totalorder %s271, 7
      %s275 = scalar_select %p274, %s271, 7
      %s276 = smul.addr %s273, 8
      %s277 = sadd.s32 %s275, %s276
      %s278 = smul.addr %s277, 4
      %s279 = scalar_lea.vmem %s0, %s278
      %p280 = pneg %p59
      %p281 = pneg %p56
      %p282 = scmp.lt.s32.totalorder %s22, 1
      %s283 = scalar_select %p282, %s22, 1
      %p284 = scmp.lt.s32.totalorder %s23, 0
      %s285 = scalar_select %p284, %s23, 0
      %s286 = smul.addr %s283, 2
      %s287 = sadd.s32 %s285, %s286
      %s288 = smul.addr %s287, 4
      %s289 = scalar_lea.vmem %s1, %s288
      %p290 = pneg %p87
      %p291 = pneg %p84
      %s292 = smul.u32 8, %s24
      %p293 = scmp.lt.s32.totalorder %s22, 1
      %s294 = scalar_select %p293, %s22, 1
      %p295 = scmp.lt.s32.totalorder %s292, 7
      %s296 = scalar_select %p295, %s292, 7
      %s297 = smul.addr %s294, 8
      %s298 = sadd.s32 %s296, %s297
      %s299 = smul.addr %s298, 8
      %s300 = scalar_lea.vmem %s2, %s299
      %p301 = pneg %p115
      %p302 = pneg %p112
      %p303 = scmp.lt.s32.totalorder %s22, 1
      %s304 = scalar_select %p303, %s22, 1
      %p305 = scmp.lt.s32.totalorder %s23, 0
      %s306 = scalar_select %p305, %s23, 0
      %s307 = sadd.s32 %s306, %s304
      %s308 = scalar_lea.vmem %s3, %s307
      %p309 = pneg %p143
      %p310 = pneg %p140
      %p311 = pneg %p171
      %p312 = pneg %p168
      %p313 = scmp.lt.s32.totalorder %s22, 1
      %s314 = scalar_select %p313, %s22, 1
      %p315 = scmp.lt.s32.totalorder %s23, 0
      %s316 = scalar_select %p315, %s23, 0
      %s317 = sadd.s32 %s316, %s314
      %s318 = smul.addr %s317, 4
      %s319 = scalar_lea.vmem %s4, %s318
      %p320 = pneg %p199
      %p321 = pneg %p196
      %p322 = scmp.lt.s32.totalorder %s22, 1
      %s323 = scalar_select %p322, %s22, 1
      %p324 = scmp.lt.s32.totalorder %s23, 0
      %s325 = scalar_select %p324, %s23, 0
      %s326 = sadd.s32 %s325, %s323
      %s327 = smul.addr %s326, 4
      %s328 = scalar_lea.vmem %s5, %s327
      %s329 = smul.u32 8, %s24
      %p330 = scmp.lt.s32.totalorder %s22, 1
      %s331 = scalar_select %p330, %s22, 1
      %p332 = scmp.lt.s32.totalorder %s329, 7
      %s333 = scalar_select %p332, %s329, 7
      %s334 = smul.addr %s331, 8
      %s335 = sadd.s32 %s333, %s334
      %s336 = smul.addr %s335, 4
      %s337 = scalar_lea.vmem %s0, %s336
      %s338 = smul.u32 8, %s24
      %p339 = scmp.lt.s32.totalorder %s22, 1
      %s340 = scalar_select %p339, %s22, 1
      %p341 = scmp.lt.s32.totalorder %s23, 0
      %s342 = scalar_select %p341, %s23, 0
      %s343 = smul.addr %s340, 2
      %s344 = sadd.s32 %s342, %s343
      %s345 = smul.addr %s344, 4
      %s346 = scalar_lea.vmem %s1, %s345
      %s347 = smul.u32 8, %s24
      %p348 = scmp.lt.s32.totalorder %s22, 1
      %s349 = scalar_select %p348, %s22, 1
      %p350 = scmp.lt.s32.totalorder %s347, 7
      %s351 = scalar_select %p350, %s347, 7
      %s352 = smul.addr %s349, 8
      %s353 = sadd.s32 %s351, %s352
      %s354 = smul.addr %s353, 8
      %s355 = scalar_lea.vmem %s2, %s354
      %s356 = smul.u32 8, %s24
      %p357 = scmp.lt.s32.totalorder %s22, 1
      %s358 = scalar_select %p357, %s22, 1
      %p359 = scmp.lt.s32.totalorder %s23, 0
      %s360 = scalar_select %p359, %s23, 0
      %s361 = sadd.s32 %s360, %s358
      %s362 = scalar_lea.vmem %s3, %s361
      %p363 = scmp.lt.s32.totalorder %s22, 1
      %s364 = scalar_select %p363, %s22, 1
      %p365 = scmp.lt.s32.totalorder %s23, 0
      %s366 = scalar_select %p365, %s23, 0
      %s367 = sadd.s32 %s366, %s364
      %s368 = smul.addr %s367, 4
      %s369 = scalar_lea.vmem %s4, %s368
      %p370 = scmp.lt.s32.totalorder %s22, 1
      %s371 = scalar_select %p370, %s22, 1
      %p372 = scmp.lt.s32.totalorder %s23, 0
      %s373 = scalar_select %p372, %s23, 0
      %s374 = sadd.s32 %s373, %s371
      %s375 = smul.addr %s374, 4
      %s376 = scalar_lea.vmem %s5, %s375
      %p378 = scmp.eq.s32.totalorder %s24, 0
      // Predicated region
      $region37: #{tpu_custom_call.1} parent=35 // pred_check
        %p379 = pneg %p378
      $region38: #{tpu_custom_call.1} parent=35 // pred_check_branch
        %381 = sbr.rel (%p379) target = $region40
      $region39: #{tpu_custom_call.1} parent=35 // pred_region
        %382 = vst [vmem:[#allocation2] sm:$0x7] inf
        %383 = vst [vmem:[#allocation3] sm:$0x7] 0
        %v384 = vlaneseq
        %v385 = vshrl.u32 %v384, 7
        %v386 = vadd.s32 %v385, 8
        %v387 = vadd.s32 %v385, 16
        %v388 = vadd.s32 %v385, 24
        %v389 = vadd.s32 %v385, 32
        %v390 = vadd.s32 %v385, 40
        %v391 = vadd.s32 %v385, 48
        %v392 = vadd.s32 %v385, 56
        %393 = vst [vmem:[#allocation4] sm:$0xff] %v385
        %394 = vst [vmem:[#allocation4 + $0x8] sm:$0xff] %v386
        %395 = vst [vmem:[#allocation4 + $0x10] sm:$0xff] %v387
        %396 = vst [vmem:[#allocation4 + $0x18] sm:$0xff] %v388
        %397 = vst [vmem:[#allocation4 + $0x20] sm:$0xff] %v389
        %398 = vst [vmem:[#allocation4 + $0x28] sm:$0xff] %v390
        %399 = vst [vmem:[#allocation4 + $0x30] sm:$0xff] %v391
        %400 = vst [vmem:[#allocation4 + $0x38] sm:$0xff] %v392
      $region40: #{tpu_custom_call.1} parent=35 // pred_fallthru
        _
      %v401 = vld [vmem:[%s337] sm:$0xf]
      %v402 = vld [vmem:[%s337 + $0x4] sm:$0xf]
      %v403 = vld [vmem:[%s337 + $0x8] sm:$0xf]
      %v404 = vld [vmem:[%s337 + $0xc] sm:$0xf]
      %v405 = vld [vmem:[%s337 + $0x10] sm:$0xf]
      %v406 = vld [vmem:[%s337 + $0x14] sm:$0xf]
      %v407 = vld [vmem:[%s337 + $0x18] sm:$0xf]
      %v408 = vld [vmem:[%s337 + $0x1c] sm:$0xf]
      %v409 = vld [vmem:[%s346] sm:$0xf]
      %v410 = vld [vmem:[%s346 + $0x4] sm:$0xf]
      %v411 = vld [vmem:[%s355] sm:$0xff]
      %v412 = vld [vmem:[%s355 + $0x8] sm:$0xff]
      %v413 = vld [vmem:[%s355 + $0x10] sm:$0xff]
      %v414 = vld [vmem:[%s355 + $0x18] sm:$0xff]
      %v415 = vld [vmem:[%s355 + $0x20] sm:$0xff]
      %v416 = vld [vmem:[%s355 + $0x28] sm:$0xff]
      %v417 = vld [vmem:[%s355 + $0x30] sm:$0xff]
      %v418 = vld [vmem:[%s355 + $0x38] sm:$0xff]
      %v427 = vunpack.c.l.b16 %v401
      %v428 = vunpack.c.l.b16 %v402
      %v429 = vunpack.c.l.b16 %v403
      %v430 = vunpack.c.l.b16 %v404
      %v431 = vunpack.c.l.b16 %v405
      %v432 = vunpack.c.l.b16 %v406
      %v433 = vunpack.c.l.b16 %v407
      %v434 = vunpack.c.l.b16 %v408
      %v435 = vpack.c.b16 %v428, %v427
      %v436 = vpack.c.b16 %v430, %v429
      %v437 = vpack.c.b16 %v432, %v431
      %v438 = vpack.c.b16 %v434, %v433
      %v441 = vunpack.c.l.b16 %v409
      %v442 = vunpack.c.l.b16 %v410
      %v443 = vpack.c.b16 %v442, %v441
      %vm445 = vcmask 130048
      %v447 = vsel %vm445, %v435, 0
      %v450 = vsel %vm445, %v436, 0
      %v453 = vsel %vm445, %v437, 0
      %v456 = vsel %vm445, %v438, 0
      %458 = vmatpush.bf16.msra.mxu0 0
      %459 = vmatpush.bf16.msra.mxu0 0
      %460 = vmatpush.bf16.msra.mxu0 0
      %461 = vmatpush.bf16.msra.mxu0 0
      %462 = vmatpush.bf16.msra.mxu0 0
      %463 = vmatpush.bf16.msra.mxu0 0
      %464 = vmatpush.bf16.msra.mxu0 0
      %465 = vmatpush.bf16.msra.mxu0 %v443
      %466 = vmatmul.bf16.gmra.mxu0 %v447
      %v467 = vpop.f32.mrf.mxu0
      %v468 = vadd.f32 0.0, %v467
      %v469 = vpop.f32.mrf.mxu0
      %v470 = vadd.f32 0.0, %v469
      %471 = vmatmul.bf16.gmra.mxu0 %v450
      %v472 = vpop.f32.mrf.mxu0
      %v473 = vadd.f32 0.0, %v472
      %v474 = vpop.f32.mrf.mxu0
      %v475 = vadd.f32 0.0, %v474
      %476 = vmatmul.bf16.gmra.mxu0 %v453
      %v477 = vpop.f32.mrf.mxu0
      %v478 = vadd.f32 0.0, %v477
      %v479 = vpop.f32.mrf.mxu0
      %v480 = vadd.f32 0.0, %v479
      %481 = vmatmul.bf16.gmra.mxu0 %v456
      %v482 = vpop.f32.mrf.mxu0
      %v483 = vadd.f32 0.0, %v482
      %v484 = vpop.f32.mrf.mxu0
      %v485 = vadd.f32 0.0, %v484
      %486 = vdwg.mxu0
      %v487 = vmul.f32 %v468, -2.0
      %v488 = vmul.f32 %v470, -2.0
      %v489 = vmul.f32 %v473, -2.0
      %v490 = vmul.f32 %v475, -2.0
      %v491 = vmul.f32 %v478, -2.0
      %v492 = vmul.f32 %v480, -2.0
      %v493 = vmul.f32 %v483, -2.0
      %v494 = vmul.f32 %v485, -2.0
      %496 = vset.pattern.permute.xlu0 0
      %497 = vperm.xlu0 %496, %v411
      %v498 = vpop.permute.xlu0 %497
      %501 = vset.pattern.permute.xlu0 0
      %502 = vperm.xlu0 %501, %v412
      %v503 = vpop.permute.xlu0 %502
      %506 = vset.pattern.permute.xlu0 0
      %507 = vperm.xlu0 %506, %v413
      %v508 = vpop.permute.xlu0 %507
      %511 = vset.pattern.permute.xlu0 0
      %512 = vperm.xlu0 %511, %v414
      %v513 = vpop.permute.xlu0 %512
      %516 = vset.pattern.permute.xlu0 0
      %517 = vperm.xlu0 %516, %v415
      %v518 = vpop.permute.xlu0 %517
      %521 = vset.pattern.permute.xlu0 0
      %522 = vperm.xlu0 %521, %v416
      %v523 = vpop.permute.xlu0 %522
      %526 = vset.pattern.permute.xlu0 0
      %527 = vperm.xlu0 %526, %v417
      %v528 = vpop.permute.xlu0 %527
      %531 = vset.pattern.permute.xlu0 0
      %532 = vperm.xlu0 %531, %v418
      %v533 = vpop.permute.xlu0 %532
      %v535 = vadd.f32 %v487, %v498
      %v536 = vadd.f32 %v488, %v503
      %v537 = vadd.f32 %v489, %v508
      %v538 = vadd.f32 %v490, %v513
      %v539 = vadd.f32 %v491, %v518
      %v540 = vadd.f32 %v492, %v523
      %v541 = vadd.f32 %v493, %v528
      %v542 = vadd.f32 %v494, %v533
      %v543 = vld [vmem:[#allocation4] sm:$0xff]
      %v544 = vld [vmem:[#allocation4 + $0x8] sm:$0xff]
      %v545 = vld [vmem:[#allocation4 + $0x10] sm:$0xff]
      %v546 = vld [vmem:[#allocation4 + $0x18] sm:$0xff]
      %v547 = vld [vmem:[#allocation4 + $0x20] sm:$0xff]
      %v548 = vld [vmem:[#allocation4 + $0x28] sm:$0xff]
      %v549 = vld [vmem:[#allocation4 + $0x30] sm:$0xff]
      %v550 = vld [vmem:[#allocation4 + $0x38] sm:$0xff]
      %v551 = vld [vmem:[#allocation2] sm:$0x7]
      %v552 = vld [vmem:[#allocation3] sm:$0x7]
      %s553 = smul.u32 %s24, 64
      %v554 = vlaneseq
      %v555 = vshrl.u32 %v554, 7
      %v556 = vmin.f32 %v535, %v539
      %v557 = vmin.f32 %v536, %v540
      %v558 = vmin.f32 %v537, %v541
      %v559 = vmin.f32 %v538, %v542
      %v560 = vmin.f32 %v556, %v557
      %v561 = vmin.f32 %v558, %v559
      %v562 = vmin.f32 %v560, %v561
      %v563 = vrot.slane %v562, 4
      %v564 = vmin.f32 %v562, %v563
      %v565 = vrot.slane %v564, 2
      %v566 = vmin.f32 %v564, %v565
      %v567 = vrot.slane %v566, 1
      %v568 = vmin.f32 %v566, %v567
      %vm569 = vcmask 1042432
      %v570 = vsel %vm569, %v551, inf
      %v571 = vrot.slane %v570, 4
      %v572 = vmin.f32 %v570, %v571
      %v573 = vrot.slane %v572, 2
      %v574 = vmin.f32 %v572, %v573
      %v575 = vrot.slane %v574, 1
      %v576 = vmin.f32 %v574, %v575
      %v577 = vmin.f32 %v568, %v576
      %vm578 = vcmp.le.f32.partialorder %v535, %v577
      %vm579 = vcmp.le.f32.partialorder %v536, %v577
      %vm580 = vcmp.le.f32.partialorder %v537, %v577
      %vm581 = vcmp.le.f32.partialorder %v538, %v577
      %vm582 = vcmp.le.f32.partialorder %v539, %v577
      %vm583 = vcmp.le.f32.partialorder %v540, %v577
      %vm584 = vcmp.le.f32.partialorder %v541, %v577
      %vm585 = vcmp.le.f32.partialorder %v542, %v577
      %vm586 = vcmp.le.f32.partialorder %v551, %v577
      %v587 = vsel %vm578, %v543, 64
      %v588 = vsel %vm579, %v544, 64
      %v589 = vsel %vm580, %v545, 64
      %v590 = vsel %vm581, %v546, 64
      %v591 = vsel %vm582, %v547, 64
      %v592 = vsel %vm583, %v548, 64
      %v593 = vsel %vm584, %v549, 64
      %v594 = vsel %vm585, %v550, 64
      %vm595 = vcmp.lt.s32.totalorder %v587, %v591
      %v596 = vsel %vm595, %v587, %v591
      %vm597 = vcmp.lt.s32.totalorder %v588, %v592
      %v598 = vsel %vm597, %v588, %v592
      %vm599 = vcmp.lt.s32.totalorder %v589, %v593
      %v600 = vsel %vm599, %v589, %v593
      %vm601 = vcmp.lt.s32.totalorder %v590, %v594
      %v602 = vsel %vm601, %v590, %v594
      %vm603 = vcmp.lt.s32.totalorder %v596, %v598
      %v604 = vsel %vm603, %v596, %v598
      %vm605 = vcmp.lt.s32.totalorder %v600, %v602
      %v606 = vsel %vm605, %v600, %v602
      %vm607 = vcmp.lt.s32.totalorder %v604, %v606
      %v608 = vsel %vm607, %v604, %v606
      %v609 = vrot.slane %v608, 4
      %vm610 = vcmp.lt.s32.totalorder %v608, %v609
      %v611 = vsel %vm610, %v608, %v609
      %v612 = vrot.slane %v611, 2
      %vm613 = vcmp.lt.s32.totalorder %v611, %v612
      %v614 = vsel %vm613, %v611, %v612
      %v615 = vrot.slane %v614, 1
      %vm616 = vcmp.lt.s32.totalorder %v614, %v615
      %v617 = vsel %vm616, %v614, %v615
      %v618 = vstv %s553
      %v619 = vadd.s32 %v617, %v618
      %v620 = vsel %vm586, %v552, 2147483647
      %v621 = vsel %vm569, %v620, 2147483647
      %v622 = vrot.slane %v621, 4
      %vm623 = vcmp.lt.s32.totalorder %v621, %v622
      %v624 = vsel %vm623, %v621, %v622
      %v625 = vrot.slane %v624, 2
      %vm626 = vcmp.lt.s32.totalorder %v624, %v625
      %v627 = vsel %vm626, %v624, %v625
      %v628 = vrot.slane %v627, 1
      %vm629 = vcmp.lt.s32.totalorder %v627, %v628
      %v630 = vsel %vm629, %v627, %v628
      %vm631 = vcmp.lt.s32.totalorder %v619, %v630
      %v632 = vsel %vm631, %v619, %v630
      %vm633 = vcmp.eq.s32.totalorder %v555, 0
      %v634 = vsel %vm633, %v577, 0.0
      %v635 = vsel %vm633, %v632, 0
      %v636 = vsub.s32 %v632, %v618
      %vm637 = vcmp.eq.s32.totalorder %v543, %v636
      %vm638 = vcmp.eq.s32.totalorder %v544, %v636
      %vm639 = vcmp.eq.s32.totalorder %v545, %v636
      %vm640 = vcmp.eq.s32.totalorder %v546, %v636
      %vm641 = vcmp.eq.s32.totalorder %v547, %v636
      %vm642 = vcmp.eq.s32.totalorder %v548, %v636
      %vm643 = vcmp.eq.s32.totalorder %v549, %v636
      %vm644 = vcmp.eq.s32.totalorder %v550, %v636
      %v645 = vsel %vm637, inf, %v535
      %v646 = vsel %vm638, inf, %v536
      %v647 = vsel %vm639, inf, %v537
      %v648 = vsel %vm640, inf, %v538
      %v649 = vsel %vm641, inf, %v539
      %v650 = vsel %vm642, inf, %v540
      %v651 = vsel %vm643, inf, %v541
      %v652 = vsel %vm644, inf, %v542
      %vm653 = vcmp.eq.s32.totalorder %v552, %v632
      %v654 = vsel %vm653, inf, %v551
      %v655 = vmin.f32 %v645, %v649
      %v656 = vmin.f32 %v646, %v650
      %v657 = vmin.f32 %v647, %v651
      %v658 = vmin.f32 %v648, %v652
      %v659 = vmin.f32 %v655, %v656
      %v660 = vmin.f32 %v657, %v658
      %v661 = vmin.f32 %v659, %v660
      %v662 = vrot.slane %v661, 4
      %v663 = vmin.f32 %v661, %v662
      %v664 = vrot.slane %v663, 2
      %v665 = vmin.f32 %v663, %v664
      %v666 = vrot.slane %v665, 1
      %v667 = vmin.f32 %v665, %v666
      %v668 = vsel %vm569, %v654, inf
      %v669 = vrot.slane %v668, 4
      %v670 = vmin.f32 %v668, %v669
      %v671 = vrot.slane %v670, 2
      %v672 = vmin.f32 %v670, %v671
      %v673 = vrot.slane %v672, 1
      %v674 = vmin.f32 %v672, %v673
      %v675 = vmin.f32 %v667, %v674
      %vm676 = vcmp.le.f32.partialorder %v645, %v675
      %vm677 = vcmp.le.f32.partialorder %v646, %v675
      %vm678 = vcmp.le.f32.partialorder %v647, %v675
      %vm679 = vcmp.le.f32.partialorder %v648, %v675
      %vm680 = vcmp.le.f32.partialorder %v649, %v675
      %vm681 = vcmp.le.f32.partialorder %v650, %v675
      %vm682 = vcmp.le.f32.partialorder %v651, %v675
      %vm683 = vcmp.le.f32.partialorder %v652, %v675
      %vm684 = vcmp.le.f32.partialorder %v654, %v675
      %v685 = vsel %vm676, %v543, 64
      %v686 = vsel %vm677, %v544, 64
      %v687 = vsel %vm678, %v545, 64
      %v688 = vsel %vm679, %v546, 64
      %v689 = vsel %vm680, %v547, 64
      %v690 = vsel %vm681, %v548, 64
      %v691 = vsel %vm682, %v549, 64
      %v692 = vsel %vm683, %v550, 64
      %vm693 = vcmp.lt.s32.totalorder %v685, %v689
      %v694 = vsel %vm693, %v685, %v689
      %vm695 = vcmp.lt.s32.totalorder %v686, %v690
      %v696 = vsel %vm695, %v686, %v690
      %vm697 = vcmp.lt.s32.totalorder %v687, %v691
      %v698 = vsel %vm697, %v687, %v691
      %vm699 = vcmp.lt.s32.totalorder %v688, %v692
      %v700 = vsel %vm699, %v688, %v692
      %vm701 = vcmp.lt.s32.totalorder %v694, %v696
      %v702 = vsel %vm701, %v694, %v696
      %vm703 = vcmp.lt.s32.totalorder %v698, %v700
      %v704 = vsel %vm703, %v698, %v700
      %vm705 = vcmp.lt.s32.totalorder %v702, %v704
      %v706 = vsel %vm705, %v702, %v704
      %v707 = vrot.slane %v706, 4
      %vm708 = vcmp.lt.s32.totalorder %v706, %v707
      %v709 = vsel %vm708, %v706, %v707
      %v710 = vrot.slane %v709, 2
      %vm711 = vcmp.lt.s32.totalorder %v709, %v710
      %v712 = vsel %vm711, %v709, %v710
      %v713 = vrot.slane %v712, 1
      %vm714 = vcmp.lt.s32.totalorder %v712, %v713
      %v715 = vsel %vm714, %v712, %v713
      %v716 = vadd.s32 %v715, %v618
      %v717 = vsel %vm684, %v552, 2147483647
      %v718 = vsel %vm569, %v717, 2147483647
      %v719 = vrot.slane %v718, 4
      %vm720 = vcmp.lt.s32.totalorder %v718, %v719
      %v721 = vsel %vm720, %v718, %v719
      %v722 = vrot.slane %v721, 2
      %vm723 = vcmp.lt.s32.totalorder %v721, %v722
      %v724 = vsel %vm723, %v721, %v722
      %v725 = vrot.slane %v724, 1
      %vm726 = vcmp.lt.s32.totalorder %v724, %v725
      %v727 = vsel %vm726, %v724, %v725
      %vm728 = vcmp.lt.s32.totalorder %v716, %v727
      %v729 = vsel %vm728, %v716, %v727
      %vm730 = vcmp.eq.s32.totalorder %v555, 1
      %v731 = vsel %vm730, %v675, %v634
      %v732 = vsel %vm730, %v729, %v635
      %v733 = vsub.s32 %v729, %v618
      %vm734 = vcmp.eq.s32.totalorder %v543, %v733
      %vm735 = vcmp.eq.s32.totalorder %v544, %v733
      %vm736 = vcmp.eq.s32.totalorder %v545, %v733
      %vm737 = vcmp.eq.s32.totalorder %v546, %v733
      %vm738 = vcmp.eq.s32.totalorder %v547, %v733
      %vm739 = vcmp.eq.s32.totalorder %v548, %v733
      %vm740 = vcmp.eq.s32.totalorder %v549, %v733
      %vm741 = vcmp.eq.s32.totalorder %v550, %v733
      %v742 = vsel %vm734, inf, %v645
      %v743 = vsel %vm735, inf, %v646
      %v744 = vsel %vm736, inf, %v647
      %v745 = vsel %vm737, inf, %v648
      %v746 = vsel %vm738, inf, %v649
      %v747 = vsel %vm739, inf, %v650
      %v748 = vsel %vm740, inf, %v651
      %v749 = vsel %vm741, inf, %v652
      %vm750 = vcmp.eq.s32.totalorder %v552, %v729
      %v751 = vsel %vm750, inf, %v654
      %v752 = vmin.f32 %v742, %v746
      %v753 = vmin.f32 %v743, %v747
      %v754 = vmin.f32 %v744, %v748
      %v755 = vmin.f32 %v745, %v749
      %v756 = vmin.f32 %v752, %v753
      %v757 = vmin.f32 %v754, %v755
      %v758 = vmin.f32 %v756, %v757
      %v759 = vrot.slane %v758, 4
      %v760 = vmin.f32 %v758, %v759
      %v761 = vrot.slane %v760, 2
      %v762 = vmin.f32 %v760, %v761
      %v763 = vrot.slane %v762, 1
      %v764 = vmin.f32 %v762, %v763
      %v765 = vsel %vm569, %v751, inf
      %v766 = vrot.slane %v765, 4
      %v767 = vmin.f32 %v765, %v766
      %v768 = vrot.slane %v767, 2
      %v769 = vmin.f32 %v767, %v768
      %v770 = vrot.slane %v769, 1
      %v771 = vmin.f32 %v769, %v770
      %v772 = vmin.f32 %v764, %v771
      %vm773 = vcmp.le.f32.partialorder %v742, %v772
      %vm774 = vcmp.le.f32.partialorder %v743, %v772
      %vm775 = vcmp.le.f32.partialorder %v744, %v772
      %vm776 = vcmp.le.f32.partialorder %v745, %v772
      %vm777 = vcmp.le.f32.partialorder %v746, %v772
      %vm778 = vcmp.le.f32.partialorder %v747, %v772
      %vm779 = vcmp.le.f32.partialorder %v748, %v772
      %vm780 = vcmp.le.f32.partialorder %v749, %v772
      %vm781 = vcmp.le.f32.partialorder %v751, %v772
      %v782 = vsel %vm773, %v543, 64
      %v783 = vsel %vm774, %v544, 64
      %v784 = vsel %vm775, %v545, 64
      %v785 = vsel %vm776, %v546, 64
      %v786 = vsel %vm777, %v547, 64
      %v787 = vsel %vm778, %v548, 64
      %v788 = vsel %vm779, %v549, 64
      %v789 = vsel %vm780, %v550, 64
      %vm790 = vcmp.lt.s32.totalorder %v782, %v786
      %v791 = vsel %vm790, %v782, %v786
      %vm792 = vcmp.lt.s32.totalorder %v783, %v787
      %v793 = vsel %vm792, %v783, %v787
      %vm794 = vcmp.lt.s32.totalorder %v784, %v788
      %v795 = vsel %vm794, %v784, %v788
      %vm796 = vcmp.lt.s32.totalorder %v785, %v789
      %v797 = vsel %vm796, %v785, %v789
      %vm798 = vcmp.lt.s32.totalorder %v791, %v793
      %v799 = vsel %vm798, %v791, %v793
      %vm800 = vcmp.lt.s32.totalorder %v795, %v797
      %v801 = vsel %vm800, %v795, %v797
      %vm802 = vcmp.lt.s32.totalorder %v799, %v801
      %v803 = vsel %vm802, %v799, %v801
      %v804 = vrot.slane %v803, 4
      %vm805 = vcmp.lt.s32.totalorder %v803, %v804
      %v806 = vsel %vm805, %v803, %v804
      %v807 = vrot.slane %v806, 2
      %vm808 = vcmp.lt.s32.totalorder %v806, %v807
      %v809 = vsel %vm808, %v806, %v807
      %v810 = vrot.slane %v809, 1
      %vm811 = vcmp.lt.s32.totalorder %v809, %v810
      %v812 = vsel %vm811, %v809, %v810
      %v813 = vadd.s32 %v812, %v618
      %v814 = vsel %vm781, %v552, 2147483647
      %v815 = vsel %vm569, %v814, 2147483647
      %v816 = vrot.slane %v815, 4
      %vm817 = vcmp.lt.s32.totalorder %v815, %v816
      %v818 = vsel %vm817, %v815, %v816
      %v819 = vrot.slane %v818, 2
      %vm820 = vcmp.lt.s32.totalorder %v818, %v819
      %v821 = vsel %vm820, %v818, %v819
      %v822 = vrot.slane %v821, 1
      %vm823 = vcmp.lt.s32.totalorder %v821, %v822
      %v824 = vsel %vm823, %v821, %v822
      %vm825 = vcmp.lt.s32.totalorder %v813, %v824
      %v826 = vsel %vm825, %v813, %v824
      %vm827 = vcmp.eq.s32.totalorder %v555, 2
      %v828 = vsel %vm827, %v772, %v731
      %v829 = vsel %vm827, %v826, %v732
      %830 = vst [vmem:[#allocation2] sm:$0x7] %v828
      %831 = vst [vmem:[#allocation3] sm:$0x7] %v829
      // Predicated region
      $region41: #{tpu_custom_call.1} parent=35 // pred_check
        %p832 = pneg %p378
      $region42: #{tpu_custom_call.1} parent=35 // pred_check_branch
        %834 = sbr.rel (%p832) target = $region44
      $region43: #{tpu_custom_call.1} parent=35 // pred_region
        %v835 = vld [vmem:[%s362] sm:$0x1]
        %v837 = vperm.slane %v835, 0
        %v839 = vadd.f32 %v828, %v837
        %v840 = vsub.f32 0.0, %v839
        %v841 = vrcp.pop 10.0
        %v842 = vmul.f32 10.0, %v841
        %v843 = vsub.f32 1.0, %v842
        %v844 = vmul.f32 %v841, %v843
        %v845 = vadd.f32 %v841, %v844
        %vm846 = vweird.f32 %v841
        %v847 = vsel %vm846, %v841, %v845
        %v848 = vmul.f32 %v840, %v847
        %v849 = vmul.f32 %v848, 1.442695
        %v850 = vpow.pop %v849
        %851 = vst [vmem:[%s369] sm:$0x7] %v850
        %852 = vst [vmem:[%s376] sm:$0x7] %v829
      $region44: #{tpu_custom_call.1} parent=35 // pred_fallthru
        _
      %p853 = scmp.lt.s32.totalorder %s22, 1
      %s854 = scalar_select %p853, %s22, 1
      %p855 = scmp.lt.s32.totalorder %s23, 0
      %s856 = scalar_select %p855, %s23, 0
      %s857 = sadd.s32 %s856, %s854
      %s858 = smul.addr %s857, 4
      %s859 = scalar_lea.vmem %s4, %s858
      %p860 = scmp.lt.s32.totalorder %s22, 1
      %s861 = scalar_select %p860, %s22, 1
      %p862 = scmp.lt.s32.totalorder %s23, 0
      %s863 = scalar_select %p862, %s23, 0
      %s864 = sadd.s32 %s863, %s861
      %s865 = smul.addr %s864, 4
      %s866 = scalar_lea.vmem %s5, %s865
      // Predicated region
      $region45: #{tpu_custom_call.1} parent=35 // pred_check
        %p867 = pneg %p168
      $region46: #{tpu_custom_call.1} parent=35 // pred_check_branch
        %869 = sbr.rel (%p867) target = $region48
      $region47: #{tpu_custom_call.1} parent=35 // pred_region
        _
      $region48: #{tpu_custom_call.1} parent=35 // pred_fallthru
        _
      // Predicated region
      $region49: #{tpu_custom_call.1} parent=35 // pred_check
        %p870 = pneg %p196
      $region50: #{tpu_custom_call.1} parent=35 // pred_check_branch
        %872 = sbr.rel (%p870) target = $region52
      $region51: #{tpu_custom_call.1} parent=35 // pred_region
        _
      $region52: #{tpu_custom_call.1} parent=35 // pred_fallthru
        _
    $region36: #{tpu_custom_call.1} parent=5 // pred_fallthru
      _
    %p873 = scmp.le.s32.totalorder 2, %s12
    // Predicated region
    $region53: #{tpu_custom_call.1} parent=5 // pred_check
      %p874 = pneg %p873
    $region54: #{tpu_custom_call.1} parent=5 // pred_check_branch
      %876 = sbr.rel (%p874) target = $region56
    $region55: #{tpu_custom_call.1} parent=5 // pred_region
      %s877 = ssub.s32 %s12, 2
      // Predicated region
      $region57: #{tpu_custom_call.1} parent=55 // pred_check
        %p878 = pneg %p174
      $region58: #{tpu_custom_call.1} parent=55 // pred_check_branch
        %880 = sbr.rel (%p878) target = $region60
      $region59: #{tpu_custom_call.1} parent=55 // pred_region
        %p881 = scmp.lt.s32.totalorder %s25, 1
        %s882 = scalar_select %p881, %s25, 1
        %p883 = scmp.lt.s32.totalorder %s26, 0
        %s884 = scalar_select %p883, %s26, 0
        %s885 = sadd.s32 %s884, %s882
        %s886 = smul.addr %s885, 4
        %s887 = scalar_lea.vmem %s4, %s886
      $region60: #{tpu_custom_call.1} parent=55 // pred_fallthru
        _
      // Predicated region
      $region61: #{tpu_custom_call.1} parent=55 // pred_check
        %p888 = pneg %p202
      $region62: #{tpu_custom_call.1} parent=55 // pred_check_branch
        %890 = sbr.rel (%p888) target = $region64
      $region63: #{tpu_custom_call.1} parent=55 // pred_region
        %p891 = scmp.lt.s32.totalorder %s25, 1
        %s892 = scalar_select %p891, %s25, 1
        %p893 = scmp.lt.s32.totalorder %s26, 0
        %s894 = scalar_select %p893, %s26, 0
        %s895 = sadd.s32 %s894, %s892
        %s896 = smul.addr %s895, 4
        %s897 = scalar_lea.vmem %s5, %s896
      $region64: #{tpu_custom_call.1} parent=55 // pred_fallthru
        _
    $region56: #{tpu_custom_call.1} parent=5 // pred_fallthru
      _
  $region6: #{tpu_custom_call.1} parent=0 // loop_footer
    %s16 = sadd.s32 1, %s12
  $region7: #{tpu_custom_call.1} parent=0 // loop_footer_branch
    %11 = sbr.rel target = $region3
  $region8: #{tpu_custom_call.1} parent=0 // loop_exit
    _

</llo_original>
